<compile_context>
chip_gen: v6e
topology: v6e:2x2x1
jax: 0.10.0
libtpu: 0.0.40
codegen_flags: <defaults>
</compile_context>

<pallas_src>
import functools

import jax
import jax.numpy as jnp
from jax.experimental import pallas as pl
from jax.experimental.pallas import tpu as pltpu


def fbc_fused_kernel(x_ref, w_ref, b_ref, mwin_ref, wfc_ref, o_ref, feat_ref,
                     *, w_win, nb):
    """One grid step = `nb` samples.

    conv1(+BN,+bias) -> ELU -> per-window variance -> logsigmoid -> partial
    fc1 logits for this chunk (no HBM round trip of the feature map).

    Shapes: x_ref (nb, K, T), w_ref (O, K), b_ref (O, 1), mwin_ref (T, n_win),
    wfc_ref (Nc, nb, O, n_win), o_ref (1, Nc, 1), feat_ref (nb, O, n_win).
    """
    w = w_ref[...]                 # (O, K), conv+BN folded (bf16 or f32)
    b = b_ref[...]                 # (O, 1), f32
    mwin = mwin_ref[...]           # (T, n_win), 0/1 indicator, f32
    inv_w = 1.0 / float(w_win)
    # torch.var is unbiased; w_win == 1 would be NaN in torch as well.
    inv_wm1 = (1.0 / float(w_win - 1)) if w_win > 1 else float("nan")

    def body(bi, carry):
        x = x_ref[bi].astype(w.dtype)                                   # (K, T)
        # conv1 + folded BatchNorm + bias: one MXU matmul, f32 accumulate.
        y = jnp.dot(w, x, preferred_element_type=jnp.float32) + b       # (O, T)
        # ELU (alpha=1).  expm1(y) == tanh(y/2)*(exp(y)+1) exactly; this form
        # keeps full accuracy near 0- using only guaranteed-lowerable EUP ops.
        em1 = jnp.tanh(y * 0.5) * (jnp.exp(y) + 1.0)
        z = jnp.where(y > 0.0, y, em1)
        # One-pass per-window unbiased variance via two MXU dots against the
        # static 0/1 window indicator (no broadcast matmul, no mwin^T operand).
        s = jnp.dot(z, mwin, preferred_element_type=jnp.float32)        # (O, n_win)
        ssq = jnp.dot(z * z, mwin, preferred_element_type=jnp.float32)  # (O, n_win)
        mu = s * inv_w
        var = jnp.maximum((ssq - float(w_win) * mu * mu) * inv_wm1, 0.0)
        # logsigmoid(var) with var >= 0 -> stable short form.
        feat_ref[bi] = -jnp.log1p(jnp.exp(-var))                        # (O, n_win)
        return carry

    # fori_loop (unrolled) bounds the live range of the (O, T) intermediates.
    jax.lax.fori_loop(0, nb, body, 0, unroll=True)

    # Fused fc1 partial contraction for this chunk.  wfc_ref holds the
    # contiguous fc-weight slab matching torch.flatten order for these samples.
    wf = wfc_ref[...].astype(jnp.float32)              # (Nc, nb, O, n_win)
    fz = feat_ref[...]                                 # (nb, O, n_win)
    t = jnp.sum(wf * fz[jnp.newaxis], axis=-1)         # (Nc, nb, O)
    t = jnp.sum(t, axis=-1)                            # (Nc, nb)
    o_ref[0] = jnp.sum(t, axis=-1, keepdims=True)      # (Nc, 1)


def logits_softmax_kernel(p_ref, b_ref, o_ref):
    # p_ref: (G, Nc) per-chunk partial logits; b_ref / o_ref: (1, Nc).
    logits = jnp.sum(p_ref[...], axis=0, keepdims=True) + b_ref[...]
    m = jnp.max(logits, axis=-1, keepdims=True)
    e = jnp.exp(logits - m)
    # F.softmax on the flattened 1-D vector -> whole-vector softmax.
    o_ref[...] = e / jnp.sum(e, axis=-1, keepdims=True)


def fbcnet_forward(x, params, *, w_win, n_win=4, batch_block=8,
                   conv_dtype=jnp.bfloat16):
    """x: (N, Nb, C, T) float32.  Returns softmax probs of shape (Nc,)."""
    N, Nb_, C_, T = x.shape
    conv_w = params["conv_w"]                 # (O, Nb, C)  (trailing 1 of torch weight squeezed)
    O = conv_w.shape[0]
    K = Nb_ * C_

    x2 = x.reshape(N, K, T).astype(jnp.float32)
    w2 = conv_w.reshape(O, K).astype(jnp.float32)

    # Fold conv bias + eval-mode BatchNorm (eps = 0.0, per BatchNorm2d(m*Nb, False)).
    # Precondition: running_var > 0 (eps=0 is faithful to the module).
    eps = 0.0
    inv_std = 1.0 / jnp.sqrt(params["bn_var"].astype(jnp.float32) + eps)
    scale = params["bn_gamma"].astype(jnp.float32) * inv_std                    # (O,)
    shift = params["bn_beta"].astype(jnp.float32) - params["bn_mean"].astype(jnp.float32) * scale
    w_fused = (w2 * scale[:, None]).astype(conv_dtype)                          # (O, K)
    b_fused = (scale * params["conv_b"].astype(jnp.float32) + shift)[:, None]   # (O, 1)

    # Static 0/1 window indicator (T, n_win); time steps beyond n_win*w_win are
    # excluded, matching the hard-coded 4-window slicing in the module.
    t_idx = jnp.arange(T)[:, None]
    j_idx = jnp.arange(n_win)[None, :]
    mwin = ((t_idx >= j_idx * w_win) & (t_idx < (j_idx + 1) * w_win)).astype(jnp.float32)

    # Batch chunk size: largest divisor of N <= batch_block, keeping >= 2 grid
    # steps when possible so both v7x TensorCores get work ("parallel" axis).
    nb = max(1, min(batch_block, N // 2 if N >= 2 else N))
    while N % nb:
        nb -= 1
    G = N // nb

    wfc = params["fc_w"].astype(jnp.float32)            # (Nc, F), F on lanes
    Nc = wfc.shape[0]
    assert wfc.shape[1] == N * O * n_win, "fc weight width must equal N*O*n_win"
    # Free row-major reshape: column f = n*O*n_win + o*n_win + j  (torch.flatten order).
    wfc4 = wfc.reshape(Nc, N, O, n_win)

    kern = functools.partial(fbc_fused_kernel, w_win=w_win, nb=nb)
    partials = pl.pallas_call(
        kern,
        out_shape=jax.ShapeDtypeStruct((G, Nc, 1), jnp.float32),
        grid=(G,),
        in_specs=[
            pl.BlockSpec((nb, K, T), lambda i: (i, 0, 0)),
            pl.BlockSpec((O, K), lambda i: (0, 0)),
            pl.BlockSpec((O, 1), lambda i: (0, 0)),
            pl.BlockSpec((T, n_win), lambda i: (0, 0)),
            pl.BlockSpec((Nc, nb, O, n_win), lambda i: (0, i, 0, 0)),
        ],
        out_specs=pl.BlockSpec((1, Nc, 1), lambda i: (i, 0, 0)),
        scratch_shapes=[pltpu.VMEM((nb, O, n_win), jnp.float32)],
        compiler_params=pltpu.CompilerParams(dimension_semantics=("parallel",)),
    )(x2, w_fused, b_fused, mwin, wfc4)

    # Trivial finish: sum per-chunk partial logits, add bias, softmax (Nc-sized).
    bfc = params["fc_b"].reshape(1, Nc).astype(jnp.float32)
    probs = pl.pallas_call(
        logits_softmax_kernel,
        out_shape=jax.ShapeDtypeStruct((1, Nc), jnp.float32),
        grid=(1,),
        in_specs=[
            pl.BlockSpec((G, Nc), lambda i: (0, 0)),
            pl.BlockSpec((1, Nc), lambda i: (0, 0)),
        ],
        out_specs=pl.BlockSpec((1, Nc), lambda i: (0, 0)),
    )(partials.reshape(G, Nc), bfc)

    return probs[0]


if __name__ == "__main__":
    # Small shapes consistent with the module's forward:
    #   N (batch) = 4, Nb (bands) = 3, C (electrodes) = 6, T (time) = 32,
    #   m = 4 -> O = m*Nb = 12, w (window) = 8 -> 4 windows, Nc = 2.
    N, Nb, C, T = 4, 3, 6, 32
    m, w_win, n_win, Nc = 4, 8, 4, 2
    O = m * Nb
    F_flat = N * O * n_win   # flatten includes batch (Linear(12607488, Nc) in the original)

    key = jax.random.PRNGKey(0)
    ks = jax.random.split(key, 9)

    params = {
        "conv_w": jax.random.normal(ks[0], (O, Nb, C), jnp.float32) * 0.1,
        "conv_b": jax.random.normal(ks[1], (O,), jnp.float32) * 0.1,
        "bn_gamma": 1.0 + 0.1 * jax.random.normal(ks[2], (O,), jnp.float32),
        "bn_beta": 0.1 * jax.random.normal(ks[3], (O,), jnp.float32),
        "bn_mean": 0.1 * jax.random.normal(ks[4], (O,), jnp.float32),
        "bn_var": jnp.abs(jax.random.normal(ks[5], (O,), jnp.float32)) + 0.5,
        "fc_w": jax.random.normal(ks[6], (Nc, F_flat), jnp.float32) * 0.05,
        "fc_b": jax.random.normal(ks[7], (Nc,), jnp.float32) * 0.05,
    }

    x = jax.random.normal(ks[8], (N, Nb, C, T), jnp.float32)

    out = fbcnet_forward(x, params, w_win=w_win, n_win=n_win)
    out = jax.block_until_ready(out)

    assert out.shape == (Nc,)
    assert bool(jnp.isfinite(out).all())
    assert abs(float(jnp.sum(out)) - 1.0) < 1e-5   # softmax sums to 1
    print("KERNEL_OK")
</pallas_src>

<mosaic_0001>
module attributes {stable_mosaic.version = 11 : i64} {
  func.func @fbc_fused_kernel(%arg0: i32, %arg1: memref<2x18x32xf32, #tpu.memory_space<vmem>>, %arg2: memref<12x18xbf16, #tpu.memory_space<vmem>>, %arg3: memref<12x1xf32, #tpu.memory_space<vmem>>, %arg4: memref<32x4xf32, #tpu.memory_space<vmem>>, %arg5: memref<2x2x12x4xf32, #tpu.memory_space<vmem>>, %arg6: memref<1x2x1xf32, #tpu.memory_space<vmem>>, %arg7: memref<2x12x4xf32, #tpu.memory_space<vmem>>) attributes {dimension_semantics = [#tpu.dimension_semantics<parallel>], iteration_bounds = array<i64: 2>, scalar_prefetch = 0 : i64, scratch_operands = 1 : i64, tpu.core_type = #tpu.core_type<tc>, window_params = [{transform_indices = @transform_0, window_bounds = array<i64: 2, 18, 32>}, {pipeline_mode = #tpu.pipeline_mode<synchronous>, transform_indices = @transform_1, window_bounds = array<i64: 12, 18>}, {pipeline_mode = #tpu.pipeline_mode<synchronous>, transform_indices = @transform_2, window_bounds = array<i64: 12, 1>}, {pipeline_mode = #tpu.pipeline_mode<synchronous>, transform_indices = @transform_3, window_bounds = array<i64: 32, 4>}, {transform_indices = @transform_4, window_bounds = array<i64: 2, 2, 12, 4>}, {transform_indices = @transform_5, window_bounds = array<i64: 1, 2, 1>}]} {
    %c0 = arith.constant 0 : index
    %c0_0 = arith.constant 0 : index
    %0 = vector.load %arg2[%c0, %c0_0] : memref<12x18xbf16, #tpu.memory_space<vmem>>, vector<12x18xbf16>
    %c0_1 = arith.constant 0 : index
    %c0_2 = arith.constant 0 : index
    %1 = vector.load %arg3[%c0_1, %c0_2] : memref<12x1xf32, #tpu.memory_space<vmem>>, vector<12x1xf32>
    %c0_3 = arith.constant 0 : index
    %c0_4 = arith.constant 0 : index
    %2 = vector.load %arg4[%c0_3, %c0_4] : memref<32x4xf32, #tpu.memory_space<vmem>>, vector<32x4xf32>
    %c0_i32 = arith.constant 0 : i32
    %3 = arith.index_cast %c0_i32 : i32 to index
    %c0_5 = arith.constant 0 : index
    %c0_6 = arith.constant 0 : index
    %4 = vector.load %arg1[%3, %c0_5, %c0_6] : memref<2x18x32xf32, #tpu.memory_space<vmem>>, vector<1x18x32xf32>
    %5 = vector.shape_cast %4 : vector<1x18x32xf32> to vector<18x32xf32>
    %6 = arith.truncf %5 : vector<18x32xf32> to vector<18x32xbf16>
    %cst = arith.constant dense<0.000000e+00> : vector<12x32xf32>
    %7 = tpu.matmul %0, %6, %cst {dimension_numbers = #tpu.dot_dimension_numbers<[1], [0], [0], [1], [0, 0, 1, 1], [], []>} : vector<12x18xbf16>, vector<18x32xbf16>, vector<12x32xf32> -> vector<12x32xf32>
    %8 = vector.broadcast %1 : vector<12x1xf32> to vector<12x32xf32>
    %9 = arith.addf %7, %8 : vector<12x32xf32>
    %cst_7 = arith.constant 5.000000e-01 : f32
    %10 = vector.broadcast %cst_7 : f32 to vector<12x32xf32>
    %11 = arith.mulf %9, %10 : vector<12x32xf32>
    %12 = math.tanh %11 : vector<12x32xf32>
    %13 = math.exp %9 : vector<12x32xf32>
    %cst_8 = arith.constant 1.000000e+00 : f32
    %14 = vector.broadcast %cst_8 : f32 to vector<12x32xf32>
    %15 = arith.addf %13, %14 : vector<12x32xf32>
    %16 = arith.mulf %12, %15 : vector<12x32xf32>
    %cst_9 = arith.constant 0.000000e+00 : f32
    %17 = vector.broadcast %cst_9 : f32 to vector<12x32xf32>
    %18 = arith.cmpf ogt, %9, %17 : vector<12x32xf32>
    %19 = arith.select %18, %9, %16 : vector<12x32xi1>, vector<12x32xf32>
    %cst_10 = arith.constant dense<0.000000e+00> : vector<12x4xf32>
    %20 = tpu.matmul %19, %2, %cst_10 {dimension_numbers = #tpu.dot_dimension_numbers<[1], [0], [0], [1], [0, 0, 1, 1], [], []>} : vector<12x32xf32>, vector<32x4xf32>, vector<12x4xf32> -> vector<12x4xf32>
    %21 = arith.mulf %19, %19 : vector<12x32xf32>
    %cst_11 = arith.constant dense<0.000000e+00> : vector<12x4xf32>
    %22 = tpu.matmul %21, %2, %cst_11 {dimension_numbers = #tpu.dot_dimension_numbers<[1], [0], [0], [1], [0, 0, 1, 1], [], []>} : vector<12x32xf32>, vector<32x4xf32>, vector<12x4xf32> -> vector<12x4xf32>
    %cst_12 = arith.constant 1.250000e-01 : f32
    %23 = vector.broadcast %cst_12 : f32 to vector<12x4xf32>
    %24 = arith.mulf %20, %23 : vector<12x4xf32>
    %cst_13 = arith.constant 8.000000e+00 : f32
    %25 = vector.broadcast %cst_13 : f32 to vector<12x4xf32>
    %26 = arith.mulf %25, %24 : vector<12x4xf32>
    %27 = arith.mulf %26, %24 : vector<12x4xf32>
    %28 = arith.subf %22, %27 : vector<12x4xf32>
    %cst_14 = arith.constant 0.142857149 : f32
    %29 = vector.broadcast %cst_14 : f32 to vector<12x4xf32>
    %30 = arith.mulf %28, %29 : vector<12x4xf32>
    %cst_15 = arith.constant 0.000000e+00 : f32
    %31 = vector.broadcast %cst_15 : f32 to vector<12x4xf32>
    %32 = arith.maximumf %30, %31 : vector<12x4xf32>
    %cst_16 = arith.constant 0.000000e+00 : f32
    %33 = vector.broadcast %cst_16 : f32 to vector<12x4xf32>
    %34 = arith.subf %33, %32 : vector<12x4xf32>
    %35 = math.exp %34 : vector<12x4xf32>
    %36 = math.log1p %35 : vector<12x4xf32>
    %cst_17 = arith.constant 0.000000e+00 : f32
    %37 = vector.broadcast %cst_17 : f32 to vector<12x4xf32>
    %38 = arith.subf %37, %36 : vector<12x4xf32>
    %39 = arith.index_cast %c0_i32 : i32 to index
    %c0_18 = arith.constant 0 : index
    %c0_19 = arith.constant 0 : index
    %40 = vector.load %arg7[%39, %c0_18, %c0_19] : memref<2x12x4xf32, #tpu.memory_space<vmem>>, vector<1x12x4xf32>
    %41 = vector.shape_cast %40 : vector<1x12x4xf32> to vector<12x4xf32>
    %42 = vector.shape_cast %38 : vector<12x4xf32> to vector<1x12x4xf32>
    tpu.vector_store %arg7[%39, %c0_18, %c0_19], %42 {strides = array<i32>} : memref<2x12x4xf32, #tpu.memory_space<vmem>>, vector<1x12x4xf32>,
    %c1_i32 = arith.constant 1 : i32
    %43 = arith.index_cast %c1_i32 : i32 to index
    %c0_20 = arith.constant 0 : index
    %c0_21 = arith.constant 0 : index
    %44 = vector.load %arg1[%43, %c0_20, %c0_21] : memref<2x18x32xf32, #tpu.memory_space<vmem>>, vector<1x18x32xf32>
    %45 = vector.shape_cast %44 : vector<1x18x32xf32> to vector<18x32xf32>
    %46 = arith.truncf %45 : vector<18x32xf32> to vector<18x32xbf16>
    %cst_22 = arith.constant dense<0.000000e+00> : vector<12x32xf32>
    %47 = tpu.matmul %0, %46, %cst_22 {dimension_numbers = #tpu.dot_dimension_numbers<[1], [0], [0], [1], [0, 0, 1, 1], [], []>} : vector<12x18xbf16>, vector<18x32xbf16>, vector<12x32xf32> -> vector<12x32xf32>
    %48 = vector.broadcast %1 : vector<12x1xf32> to vector<12x32xf32>
    %49 = arith.addf %47, %48 : vector<12x32xf32>
    %cst_23 = arith.constant 5.000000e-01 : f32
    %50 = vector.broadcast %cst_23 : f32 to vector<12x32xf32>
    %51 = arith.mulf %49, %50 : vector<12x32xf32>
    %52 = math.tanh %51 : vector<12x32xf32>
    %53 = math.exp %49 : vector<12x32xf32>
    %cst_24 = arith.constant 1.000000e+00 : f32
    %54 = vector.broadcast %cst_24 : f32 to vector<12x32xf32>
    %55 = arith.addf %53, %54 : vector<12x32xf32>
    %56 = arith.mulf %52, %55 : vector<12x32xf32>
    %cst_25 = arith.constant 0.000000e+00 : f32
    %57 = vector.broadcast %cst_25 : f32 to vector<12x32xf32>
    %58 = arith.cmpf ogt, %49, %57 : vector<12x32xf32>
    %59 = arith.select %58, %49, %56 : vector<12x32xi1>, vector<12x32xf32>
    %cst_26 = arith.constant dense<0.000000e+00> : vector<12x4xf32>
    %60 = tpu.matmul %59, %2, %cst_26 {dimension_numbers = #tpu.dot_dimension_numbers<[1], [0], [0], [1], [0, 0, 1, 1], [], []>} : vector<12x32xf32>, vector<32x4xf32>, vector<12x4xf32> -> vector<12x4xf32>
    %61 = arith.mulf %59, %59 : vector<12x32xf32>
    %cst_27 = arith.constant dense<0.000000e+00> : vector<12x4xf32>
    %62 = tpu.matmul %61, %2, %cst_27 {dimension_numbers = #tpu.dot_dimension_numbers<[1], [0], [0], [1], [0, 0, 1, 1], [], []>} : vector<12x32xf32>, vector<32x4xf32>, vector<12x4xf32> -> vector<12x4xf32>
    %cst_28 = arith.constant 1.250000e-01 : f32
    %63 = vector.broadcast %cst_28 : f32 to vector<12x4xf32>
    %64 = arith.mulf %60, %63 : vector<12x4xf32>
    %cst_29 = arith.constant 8.000000e+00 : f32
    %65 = vector.broadcast %cst_29 : f32 to vector<12x4xf32>
    %66 = arith.mulf %65, %64 : vector<12x4xf32>
    %67 = arith.mulf %66, %64 : vector<12x4xf32>
    %68 = arith.subf %62, %67 : vector<12x4xf32>
    %cst_30 = arith.constant 0.142857149 : f32
    %69 = vector.broadcast %cst_30 : f32 to vector<12x4xf32>
    %70 = arith.mulf %68, %69 : vector<12x4xf32>
    %cst_31 = arith.constant 0.000000e+00 : f32
    %71 = vector.broadcast %cst_31 : f32 to vector<12x4xf32>
    %72 = arith.maximumf %70, %71 : vector<12x4xf32>
    %cst_32 = arith.constant 0.000000e+00 : f32
    %73 = vector.broadcast %cst_32 : f32 to vector<12x4xf32>
    %74 = arith.subf %73, %72 : vector<12x4xf32>
    %75 = math.exp %74 : vector<12x4xf32>
    %76 = math.log1p %75 : vector<12x4xf32>
    %cst_33 = arith.constant 0.000000e+00 : f32
    %77 = vector.broadcast %cst_33 : f32 to vector<12x4xf32>
    %78 = arith.subf %77, %76 : vector<12x4xf32>
    %79 = arith.index_cast %c1_i32 : i32 to index
    %c0_34 = arith.constant 0 : index
    %c0_35 = arith.constant 0 : index
    %80 = vector.load %arg7[%79, %c0_34, %c0_35] : memref<2x12x4xf32, #tpu.memory_space<vmem>>, vector<1x12x4xf32>
    %81 = vector.shape_cast %80 : vector<1x12x4xf32> to vector<12x4xf32>
    %82 = vector.shape_cast %78 : vector<12x4xf32> to vector<1x12x4xf32>
    tpu.vector_store %arg7[%79, %c0_34, %c0_35], %82 {strides = array<i32>} : memref<2x12x4xf32, #tpu.memory_space<vmem>>, vector<1x12x4xf32>,
    %c2_i32 = arith.constant 2 : i32
    %c0_36 = arith.constant 0 : index
    %c0_37 = arith.constant 0 : index
    %c0_38 = arith.constant 0 : index
    %c0_39 = arith.constant 0 : index
    %83 = vector.load %arg5[%c0_36, %c0_37, %c0_38, %c0_39] : memref<2x2x12x4xf32, #tpu.memory_space<vmem>>, vector<2x2x12x4xf32>
    %c0_40 = arith.constant 0 : index
    %c0_41 = arith.constant 0 : index
    %c0_42 = arith.constant 0 : index
    %84 = vector.load %arg7[%c0_40, %c0_41, %c0_42] : memref<2x12x4xf32, #tpu.memory_space<vmem>>, vector<2x12x4xf32>
    %85 = vector.shape_cast %84 : vector<2x12x4xf32> to vector<1x2x12x4xf32>
    %86 = vector.broadcast %85 : vector<1x2x12x4xf32> to vector<2x2x12x4xf32>
    %87 = arith.mulf %83, %86 : vector<2x2x12x4xf32>
    %cst_43 = arith.constant dense<0.000000e+00> : vector<2x2x12xf32>
    %88 = vector.multi_reduction <add>, %87, %cst_43 [3] : vector<2x2x12x4xf32> to vector<2x2x12xf32>
    %cst_44 = arith.constant dense<0.000000e+00> : vector<2x2xf32>
    %89 = vector.multi_reduction <add>, %88, %cst_44 [2] : vector<2x2x12xf32> to vector<2x2xf32>
    %cst_45 = arith.constant dense<0.000000e+00> : vector<2xf32>
    %90 = vector.multi_reduction <add>, %89, %cst_45 [1] : vector<2x2xf32> to vector<2xf32>
    %91 = vector.shape_cast %90 : vector<2xf32> to vector<2x1xf32>
    %c0_46 = arith.constant 0 : index
    %c0_47 = arith.constant 0 : index
    %c0_48 = arith.constant 0 : index
    %92 = vector.load %arg6[%c0_46, %c0_47, %c0_48] : memref<1x2x1xf32, #tpu.memory_space<vmem>>, vector<1x2x1xf32>
    %93 = vector.shape_cast %92 : vector<1x2x1xf32> to vector<2x1xf32>
    %94 = vector.shape_cast %91 : vector<2x1xf32> to vector<1x2x1xf32>
    tpu.vector_store %arg6[%c0_46, %c0_47, %c0_48], %94 {strides = array<i32>} : memref<1x2x1xf32, #tpu.memory_space<vmem>>, vector<1x2x1xf32>,
    return
  }
  func.func @transform_0(%arg0: i32) -> (i32, i32, i32) {
    %c0_i32 = arith.constant 0 : i32
    %c0_i32_0 = arith.constant 0 : i32
    %c0_i32_1 = arith.constant 0 : i32
    return %arg0, %c0_i32, %c0_i32_0 : i32, i32, i32
  }
  func.func @transform_1(%arg0: i32) -> (i32, i32) {
    %c0_i32 = arith.constant 0 : i32
    %c0_i32_0 = arith.constant 0 : i32
    %c0_i32_1 = arith.constant 0 : i32
    return %c0_i32, %c0_i32_0 : i32, i32
  }
  func.func @transform_2(%arg0: i32) -> (i32, i32) {
    %c0_i32 = arith.constant 0 : i32
    %c0_i32_0 = arith.constant 0 : i32
    %c0_i32_1 = arith.constant 0 : i32
    return %c0_i32, %c0_i32_0 : i32, i32
  }
  func.func @transform_3(%arg0: i32) -> (i32, i32) {
    %c0_i32 = arith.constant 0 : i32
    %c0_i32_0 = arith.constant 0 : i32
    %c0_i32_1 = arith.constant 0 : i32
    return %c0_i32, %c0_i32_0 : i32, i32
  }
  func.func @transform_4(%arg0: i32) -> (i32, i32, i32, i32) {
    %c0_i32 = arith.constant 0 : i32
    %c0_i32_0 = arith.constant 0 : i32
    %c0_i32_1 = arith.constant 0 : i32
    %c0_i32_2 = arith.constant 0 : i32
    return %c0_i32, %arg0, %c0_i32_0, %c0_i32_1 : i32, i32, i32, i32
  }
  func.func @transform_5(%arg0: i32) -> (i32, i32, i32) {
    %c0_i32 = arith.constant 0 : i32
    %c0_i32_0 = arith.constant 0 : i32
    %c0_i32_1 = arith.constant 0 : i32
    return %arg0, %c0_i32, %c0_i32_0 : i32, i32, i32
  }
}

</mosaic_0001>

<llo_original>
// kernel: tpu_custom_call.1
$region0: #{tpu_custom_call.1}
  #allocation0 [shape = 'u32[]', space=smem, size = 0x4, offset = 0x4, fixed_abs, tag = 'smem constant byte address 0x4 - core index']
  #allocation1 [shape = 'u32[144,128]{1,0:T(1,128)}', space=vmem, size = 0x12000, scoped, tag = 'internal scratch']
  #allocation2 [shape = 'f32[2,12,4]{2,1,0:T(8,128)}', space=vmem, size = 0x4000, scoped, tag = 'scratch operand']
  %s0 = inlined_call_operand.vmem [shape: f32[4,18,32], index: 0, kind: input, shape index: {}]
  %s1 = inlined_call_operand.vmem [shape: bf16[12,18], index: 1, kind: input, shape index: {}]
  %s2 = inlined_call_operand.vmem [shape: f32[12,1], index: 2, kind: input, shape index: {}]
  %s3 = inlined_call_operand.vmem [shape: f32[32,4], index: 3, kind: input, shape index: {}]
  %s4 = inlined_call_operand.vmem [shape: f32[2,4,12,4], index: 4, kind: input, shape index: {}]
  %s5 = inlined_call_operand.vmem [shape: f32[2,2,1], index: 5, kind: output, shape index: {}]
  %s6 = sld [smem:[#allocation0]]
  $region91: #{tpu_custom_call.1} parent=0
    _
  %s8 = ssub.s32 1, %s6
  %s9 = scalar_select 0, %s8, %s6
  $region1: #{tpu_custom_call.1} parent=0
    #allocation3 [shape = 'u8[65536]{0}', space=vmem, size = 0x10000, scoped, tag = 'input window, operand 4']
    loop: start=0, step=1, limit=4
    $region2: #{tpu_custom_call.1} parent=1 // loop_pre_header
      _
    $region3: #{tpu_custom_call.1} parent=1 // loop_header
      %s11 = sphi 0, %s15
      %p12 = scmp.ge.s32.totalorder %s11, 4
      %s21 = sphi 0, %s23
      %s24 = sphi 0, %s21
      %s25 = sphi 0, %s24
      %s41 = sphi 0, %s25
      %s45 = sphi 0, %s45
      %s47 = sphi 0, %s45
      %s48 = sphi 0, %s47
      %s62 = sphi 0, %s48
      %s66 = sphi 0, %s66
      %s68 = sphi 0, %s66
      %s69 = sphi 0, %s68
      %s83 = sphi 0, %s69
      %s87 = sphi 0, %s87
      %s89 = sphi 0, %s87
      %s90 = sphi 0, %s89
      %s104 = sphi 0, %s90
      %s110 = sphi 0, %s112
      %s113 = sphi 0, %s110
      %s114 = sphi 0, %s113
      %s130 = sphi 0, %s114
      %s136 = sphi 0, %s138
      %s139 = sphi 0, %s136
      %s140 = sphi 0, %s139
      %s156 = sphi 0, %s140
    $region4: #{tpu_custom_call.1} parent=1 // loop_header_branch
      %14 = sbr.rel (%p12) target = $region8
    $region5: #{tpu_custom_call.1} parent=1 // loop_body
      %s16 = ssub.s32 %s11, 1
      %s17 = ssub.s32 %s11, 2
      %s18 = sadd.s32 %s11, 1
      %s19 = ssub.s32 %s11, %s18
      %p20 = scmp.eq.s32.totalorder %s19, 0
      %s22 = sadd.s32 %s21, 1
      %s23 = scalar_select %p20, %s21, %s22
      %p26 = pneg %p20
      %p27 = scmp.eq.s32.totalorder %s11, 1
      %p28 = por %p26, %p27
      %p29 = scmp.ne.s32.totalorder %s21, %s24
      %p30 = scmp.eq.s32.totalorder %s11, 0
      %p31 = por %p29, %p30
      %p32 = scmp.ne.s32.totalorder %s21, %s24
      %p33 = scmp.eq.s32.totalorder %s16, 1
      %p34 = por %p32, %p33
      %p35 = scmp.ne.s32.totalorder %s24, %s25
      %p36 = scmp.eq.s32.totalorder %s16, 0
      %p37 = por %p35, %p36
      %p38 = scmp.ne.s32.totalorder %s24, %s25
      %p39 = scmp.eq.s32.totalorder %s17, 1
      %p40 = por %p38, %p39
      %p42 = scmp.ne.s32.totalorder %s25, %s41
      %p43 = scmp.eq.s32.totalorder %s17, 0
      %p44 = por %p42, %p43
      %s46 = sadd.s32 %s45, 1
      %p49 = scmp.eq.s32.totalorder %s11, 1
      %p50 = scmp.ne.s32.totalorder %s45, %s47
      %p51 = scmp.eq.s32.totalorder %s11, 0
      %p52 = por %p50, %p51
      %p53 = scmp.ne.s32.totalorder %s45, %s47
      %p54 = scmp.eq.s32.totalorder %s16, 1
      %p55 = por %p53, %p54
      %p56 = scmp.ne.s32.totalorder %s47, %s48
      %p57 = scmp.eq.s32.totalorder %s16, 0
      %p58 = por %p56, %p57
      %p59 = scmp.ne.s32.totalorder %s47, %s48
      %p60 = scmp.eq.s32.totalorder %s17, 1
      %p61 = por %p59, %p60
      %p63 = scmp.ne.s32.totalorder %s48, %s62
      %p64 = scmp.eq.s32.totalorder %s17, 0
      %p65 = por %p63, %p64
      %s67 = sadd.s32 %s66, 1
      %p70 = scmp.eq.s32.totalorder %s11, 1
      %p71 = scmp.ne.s32.totalorder %s66, %s68
      %p72 = scmp.eq.s32.totalorder %s11, 0
      %p73 = por %p71, %p72
      %p74 = scmp.ne.s32.totalorder %s66, %s68
      %p75 = scmp.eq.s32.totalorder %s16, 1
      %p76 = por %p74, %p75
      %p77 = scmp.ne.s32.totalorder %s68, %s69
      %p78 = scmp.eq.s32.totalorder %s16, 0
      %p79 = por %p77, %p78
      %p80 = scmp.ne.s32.totalorder %s68, %s69
      %p81 = scmp.eq.s32.totalorder %s17, 1
      %p82 = por %p80, %p81
      %p84 = scmp.ne.s32.totalorder %s69, %s83
      %p85 = scmp.eq.s32.totalorder %s17, 0
      %p86 = por %p84, %p85
      %s88 = sadd.s32 %s87, 1
      %p91 = scmp.eq.s32.totalorder %s11, 1
      %p92 = scmp.ne.s32.totalorder %s87, %s89
      %p93 = scmp.eq.s32.totalorder %s11, 0
      %p94 = por %p92, %p93
      %p95 = scmp.ne.s32.totalorder %s87, %s89
      %p96 = scmp.eq.s32.totalorder %s16, 1
      %p97 = por %p95, %p96
      %p98 = scmp.ne.s32.totalorder %s89, %s90
      %p99 = scmp.eq.s32.totalorder %s16, 0
      %p100 = por %p98, %p99
      %p101 = scmp.ne.s32.totalorder %s89, %s90
      %p102 = scmp.eq.s32.totalorder %s17, 1
      %p103 = por %p101, %p102
      %p105 = scmp.ne.s32.totalorder %s90, %s104
      %p106 = scmp.eq.s32.totalorder %s17, 0
      %p107 = por %p105, %p106
      %s108 = ssub.s32 %s11, %s18
      %p109 = scmp.eq.s32.totalorder %s108, 0
      %s111 = sadd.s32 %s110, 1
      %s112 = scalar_select %p109, %s110, %s111
      %p115 = pneg %p109
      %p116 = scmp.eq.s32.totalorder %s11, 1
      %p117 = por %p115, %p116
      %p118 = scmp.ne.s32.totalorder %s110, %s113
      %p119 = scmp.eq.s32.totalorder %s11, 0
      %p120 = por %p118, %p119
      %p121 = scmp.ne.s32.totalorder %s110, %s113
      %p122 = scmp.eq.s32.totalorder %s16, 1
      %p123 = por %p121, %p122
      %p124 = scmp.ne.s32.totalorder %s113, %s114
      %p125 = scmp.eq.s32.totalorder %s16, 0
      %p126 = por %p124, %p125
      %p127 = scmp.ne.s32.totalorder %s113, %s114
      %p128 = scmp.eq.s32.totalorder %s17, 1
      %p129 = por %p127, %p128
      %p131 = scmp.ne.s32.totalorder %s114, %s130
      %p132 = scmp.eq.s32.totalorder %s17, 0
      %p133 = por %p131, %p132
      %s134 = ssub.s32 %s11, %s18
      %p135 = scmp.eq.s32.totalorder %s134, 0
      %s137 = sadd.s32 %s136, 1
      %s138 = scalar_select %p135, %s136, %s137
      %p141 = pneg %p135
      %p142 = scmp.eq.s32.totalorder %s11, 1
      %p143 = por %p141, %p142
      %p144 = scmp.ne.s32.totalorder %s136, %s139
      %p145 = scmp.eq.s32.totalorder %s11, 0
      %p146 = por %p144, %p145
      %p147 = scmp.ne.s32.totalorder %s136, %s139
      %p148 = scmp.eq.s32.totalorder %s16, 1
      %p149 = por %p147, %p148
      %p150 = scmp.ne.s32.totalorder %s139, %s140
      %p151 = scmp.eq.s32.totalorder %s16, 0
      %p152 = por %p150, %p151
      %p153 = scmp.ne.s32.totalorder %s139, %s140
      %p154 = scmp.eq.s32.totalorder %s17, 1
      %p155 = por %p153, %p154
      %p157 = scmp.ne.s32.totalorder %s140, %s156
      %p158 = scmp.eq.s32.totalorder %s17, 0
      %p159 = por %p157, %p158
      %p160 = scmp.le.s32.totalorder 1, %s11
      %p161 = scmp.lt.s32.totalorder %s11, 3
      %p162 = pnand %p160, %p161
      %p163 = pneg %p162
      // Predicated region
      $region9: #{tpu_custom_call.1} parent=5 // pred_check
        _
      $region10: #{tpu_custom_call.1} parent=5 // pred_check_branch
        %165 = sbr.rel (%p162) target = $region12
      $region11: #{tpu_custom_call.1} parent=5 // pred_region
        %s166 = ssub.s32 %s11, 1
        // Predicated region
        $region13: #{tpu_custom_call.1} parent=11 // pred_check
          %p167 = pneg %p58
        $region14: #{tpu_custom_call.1} parent=11 // pred_check_branch
          %169 = sbr.rel (%p167) target = $region16
        $region15: #{tpu_custom_call.1} parent=11 // pred_region
          _
        $region16: #{tpu_custom_call.1} parent=11 // pred_fallthru
          _
        // Predicated region
        $region17: #{tpu_custom_call.1} parent=11 // pred_check
          %p170 = pneg %p79
        $region18: #{tpu_custom_call.1} parent=11 // pred_check_branch
          %172 = sbr.rel (%p170) target = $region20
        $region19: #{tpu_custom_call.1} parent=11 // pred_region
          _
        $region20: #{tpu_custom_call.1} parent=11 // pred_fallthru
          _
        // Predicated region
        $region21: #{tpu_custom_call.1} parent=11 // pred_check
          %p173 = pneg %p100
        $region22: #{tpu_custom_call.1} parent=11 // pred_check_branch
          %175 = sbr.rel (%p173) target = $region24
        $region23: #{tpu_custom_call.1} parent=11 // pred_region
          _
        $region24: #{tpu_custom_call.1} parent=11 // pred_fallthru
          _
      $region12: #{tpu_custom_call.1} parent=5 // pred_fallthru
        _
      %p176 = scmp.lt.s32.totalorder %s11, 2
      // Predicated region
      $region25: #{tpu_custom_call.1} parent=5 // pred_check
        %p177 = pneg %p176
      $region26: #{tpu_custom_call.1} parent=5 // pred_check_branch
        %179 = sbr.rel (%p177) target = $region28
      $region27: #{tpu_custom_call.1} parent=5 // pred_region
        // Predicated region
        $region29: #{tpu_custom_call.1} parent=27 // pred_check
          %p180 = pneg %p31
        $region30: #{tpu_custom_call.1} parent=27 // pred_check_branch
          %182 = sbr.rel (%p180) target = $region32
        $region31: #{tpu_custom_call.1} parent=27 // pred_region
          %s183 = smul.u32 2, %s11
          %p184 = scmp.lt.s32.totalorder %s183, 3
          %s185 = scalar_select %p184, %s183, 3
          %s186 = smul.addr %s185, 3
          %s187 = smul.addr %s186, 8
          %s188 = scalar_lea.vmem %s0, %s187
          %s189 = smul.u32 2, %s11
        $region32: #{tpu_custom_call.1} parent=27 // pred_fallthru
          _
        // Predicated region
        $region33: #{tpu_custom_call.1} parent=27 // pred_check
          %p190 = pneg %p120
        $region34: #{tpu_custom_call.1} parent=27 // pred_check_branch
          %192 = sbr.rel (%p190) target = $region36
        $region35: #{tpu_custom_call.1} parent=27 // pred_region
          %s193 = sand.u32 %s110, 1
          %s194 = sand.u32 %s110, 1
          %s195 = smul.addr %s194, 64
          %s196 = scalar_lea.vmem [#allocation3], %s195
          %s197 = smul.u32 2, %s11
          %s198 = smul.addr %s197, 2
          %s199 = smul.addr %s198, 8
          %s200 = scalar_lea.vmem %s4, %s199
          // Predicated region
          $region37: #{tpu_custom_call.1} parent=35 // pred_check
            _
          $region38: #{tpu_custom_call.1} parent=35 // pred_check_branch
            %202 = sbr.rel (0) target = $region40
          $region39: #{tpu_custom_call.1} parent=35 // pred_region
            // Predicated region
            $region41: #{tpu_custom_call.1} parent=39 // pred_check
              _
            $region42: #{tpu_custom_call.1} parent=39 // pred_check_branch
              %204 = sbr.rel (0) target = $region44
            $region43: #{tpu_custom_call.1} parent=39 // pred_region
              // Predicated region
              $region56: #{tpu_custom_call.1} parent=43 // pred_check
                _
              $region57: #{tpu_custom_call.1} parent=43 // pred_check_branch
                %234 = sbr.rel (0) target = $region59
              $region58: #{tpu_custom_call.1} parent=43 // pred_region
                loop: start=0, step=1, limit=1
                $region60: #{tpu_custom_call.1} parent=58 // loop_pre_header
                  _
                $region61: #{tpu_custom_call.1} parent=58 // loop_header
                  %s236 = sphi 0, %s240
                  %p237 = scmp.ge.s32.totalorder %s236, 1
                  %s241 = sphi %s200, %s200
                  %s242 = sphi %s196, %s196
                $region62: #{tpu_custom_call.1} parent=58 // loop_header_branch
                  %239 = sbr.rel (%p237) target = $region66
                $region63: #{tpu_custom_call.1} parent=58 // loop_body
                  %v243 = vld [vmem:[%s241] sm:$0xff]
                  %244 = vst [vmem:[%s242] sm:$0xff] %v243
                  %v245 = vld [vmem:[%s241 + $0x8] sm:$0xff]
                  %246 = vst [vmem:[%s242 + $0x8] sm:$0xff] %v245
                  %v247 = vld [vmem:[%s241 + $0x10] sm:$0xff]
                  %248 = vst [vmem:[%s242 + $0x10] sm:$0xff] %v247
                  %v249 = vld [vmem:[%s241 + $0x18] sm:$0xff]
                  %250 = vst [vmem:[%s242 + $0x18] sm:$0xff] %v249
                  %v251 = vld [vmem:[%s241 + $0x40] sm:$0xff]
                  %252 = vst [vmem:[%s242 + $0x20] sm:$0xff] %v251
                  %v253 = vld [vmem:[%s241 + $0x48] sm:$0xff]
                  %254 = vst [vmem:[%s242 + $0x28] sm:$0xff] %v253
                  %v255 = vld [vmem:[%s241 + $0x50] sm:$0xff]
                  %256 = vst [vmem:[%s242 + $0x30] sm:$0xff] %v255
                  %v257 = vld [vmem:[%s241 + $0x58] sm:$0xff]
                  %258 = vst [vmem:[%s242 + $0x38] sm:$0xff] %v257
                $region64: #{tpu_custom_call.1} parent=58 // loop_footer
                  %s240 = sadd.s32 1, %s236
                $region65: #{tpu_custom_call.1} parent=58 // loop_footer_branch
                  %235 = sbr.rel target = $region61
                $region66: #{tpu_custom_call.1} parent=58 // loop_exit
                  _
              $region59: #{tpu_custom_call.1} parent=43 // pred_fallthru
                _
              // Predicated region
              $region67: #{tpu_custom_call.1} parent=43 // pred_check
                _
              $region68: #{tpu_custom_call.1} parent=43 // pred_check_branch
                %260 = sbr.rel target = $region70
              $region69: #{tpu_custom_call.1} parent=43 // pred_region
                _
              $region70: #{tpu_custom_call.1} parent=43 // pred_fallthru
                _
            $region44: #{tpu_custom_call.1} parent=39 // pred_fallthru
              _
            // Predicated region
            $region45: #{tpu_custom_call.1} parent=39 // pred_check
              _
            $region46: #{tpu_custom_call.1} parent=39 // pred_check_branch
              %206 = sbr.rel target = $region48
            $region47: #{tpu_custom_call.1} parent=39 // pred_region
              %s208 = ssub.s32 256, 1
              loop: start=0, step=1, limit=1
              $region49: #{tpu_custom_call.1} parent=47 // loop_pre_header
                _
              $region50: #{tpu_custom_call.1} parent=47 // loop_header
                %s210 = sphi 0, %s214
                %p211 = scmp.ge.s32.totalorder %s210, 1
                %s215 = sphi %s200, %s200
                %s216 = sphi %s196, %s196
              $region51: #{tpu_custom_call.1} parent=47 // loop_header_branch
                %213 = sbr.rel (%p211) target = $region55
              $region52: #{tpu_custom_call.1} parent=47 // loop_body
                %v217 = vld [vmem:[%s215] sm:%s208]
                %218 = vst [vmem:[%s216] sm:%s208] %v217
                %v219 = vld [vmem:[%s215 + $0x8] sm:%s208]
                %220 = vst [vmem:[%s216 + $0x8] sm:%s208] %v219
                %v221 = vld [vmem:[%s215 + $0x10] sm:%s208]
                %222 = vst [vmem:[%s216 + $0x10] sm:%s208] %v221
                %v223 = vld [vmem:[%s215 + $0x18] sm:%s208]
                %224 = vst [vmem:[%s216 + $0x18] sm:%s208] %v223
                %v225 = vld [vmem:[%s215 + $0x40] sm:%s208]
                %226 = vst [vmem:[%s216 + $0x20] sm:%s208] %v225
                %v227 = vld [vmem:[%s215 + $0x48] sm:%s208]
                %228 = vst [vmem:[%s216 + $0x28] sm:%s208] %v227
                %v229 = vld [vmem:[%s215 + $0x50] sm:%s208]
                %230 = vst [vmem:[%s216 + $0x30] sm:%s208] %v229
                %v231 = vld [vmem:[%s215 + $0x58] sm:%s208]
                %232 = vst [vmem:[%s216 + $0x38] sm:%s208] %v231
              $region53: #{tpu_custom_call.1} parent=47 // loop_footer
                %s214 = sadd.s32 1, %s210
              $region54: #{tpu_custom_call.1} parent=47 // loop_footer_branch
                %209 = sbr.rel target = $region50
              $region55: #{tpu_custom_call.1} parent=47 // loop_exit
                _
            $region48: #{tpu_custom_call.1} parent=39 // pred_fallthru
              _
          $region40: #{tpu_custom_call.1} parent=35 // pred_fallthru
            _
          %261 = vnop
        $region36: #{tpu_custom_call.1} parent=27 // pred_fallthru
          _
      $region28: #{tpu_custom_call.1} parent=5 // pred_fallthru
        _
      %p262 = scmp.le.s32.totalorder 1, %s11
      %p263 = scmp.lt.s32.totalorder %s11, 3
      %p264 = pnand %p262, %p263
      %p265 = pneg %p264
      // Predicated region
      $region71: #{tpu_custom_call.1} parent=5 // pred_check
        _
      $region72: #{tpu_custom_call.1} parent=5 // pred_check_branch
        %267 = sbr.rel (%p264) target = $region74
      $region73: #{tpu_custom_call.1} parent=5 // pred_region
        %s268 = ssub.s32 %s11, 1
        %s269 = sand.u32 %s113, 1
        %s270 = sand.u32 %s113, 1
        %s271 = smul.addr %s270, 64
        %s272 = scalar_lea.vmem [#allocation3], %s271
        // Predicated region
        $region75: #{tpu_custom_call.1} parent=73 // pred_check
          %p273 = pneg %p126
        $region76: #{tpu_custom_call.1} parent=73 // pred_check_branch
          %275 = sbr.rel (%p273) target = $region78
        $region77: #{tpu_custom_call.1} parent=73 // pred_region
          _
        $region78: #{tpu_custom_call.1} parent=73 // pred_fallthru
          _
        %s276 = smul.u32 2, %s16
        %p277 = scmp.lt.s32.totalorder %s276, 3
        %s278 = scalar_select %p277, %s276, 3
        %s279 = smul.addr %s278, 3
        %s280 = smul.addr %s279, 8
        %s281 = scalar_lea.vmem %s0, %s280
        %p282 = pneg %p37
        %p283 = pneg %p34
        %p284 = pneg %p58
        %p285 = pneg %p55
        %p286 = pneg %p79
        %p287 = pneg %p76
        %p288 = pneg %p100
        %p289 = pneg %p97
        %s290 = sand.u32 %s113, 1
        %s291 = sand.u32 %s113, 1
        %s292 = smul.addr %s291, 64
        %s293 = scalar_lea.vmem [#allocation3], %s292
        %p294 = pneg %p126
        %p295 = pneg %p123
        %p296 = pneg %p152
        %p297 = pneg %p149
        %p298 = scmp.lt.s32.totalorder %s16, 1
        %s299 = scalar_select %p298, %s16, 1
        %s300 = smul.addr %s299, 2
        %s301 = scalar_lea.vmem %s5, %s300
        %s302 = smul.u32 2, %s16
        %p303 = scmp.lt.s32.totalorder %s302, 3
        %s304 = scalar_select %p303, %s302, 3
        %s305 = smul.addr %s304, 3
        %s306 = smul.addr %s305, 8
        %s307 = scalar_lea.vmem %s0, %s306
        %s308 = smul.u32 2, %s16
        %s309 = smul.u32 2, %s16
        %p310 = scmp.lt.s32.totalorder %s16, 1
        %s311 = scalar_select %p310, %s16, 1
        %s312 = smul.addr %s311, 2
        %s313 = scalar_lea.vmem %s5, %s312
        %v315 = vld [vmem:[%s1] sm:$0xf]
        %v316 = vld [vmem:[%s1 + $0x4] sm:$0x3]
        %v317 = vld [vmem:[%s2] sm:$0xff]
        %v318 = vld [vmem:[%s2 + $0x8] sm:$0xf]
        %v319 = vld [vmem:[%s3] sm:$0xff]
        %v320 = vld [vmem:[%s3 + $0x8] sm:$0xff]
        %v321 = vld [vmem:[%s3 + $0x10] sm:$0xff]
        %v322 = vld [vmem:[%s3 + $0x18] sm:$0xff]
        %v323 = vld [vmem:[%s307] sm:$0xff]
        %v324 = vld [vmem:[%s307 + $0x8] sm:$0xff]
        %v325 = vld [vmem:[%s307 + $0x10] sm:$0x3]
        %v326 = vpack.c.bf16 %v324, %v323
        %v327 = vpack.c.bf16 %v325, %v325
        %329 = vset.pattern.permute.xlu0 0
        %330 = vperm.xlu0 %329, %v317
        %v331 = vpop.permute.xlu0 %330
        %334 = vset.pattern.permute.xlu0 0
        %335 = vperm.xlu0 %334, %v318
        %v336 = vpop.permute.xlu0 %335
        %v340 = vunpack.c.l.b16 %v315
        %v341 = vunpack.c.l.b16 %v316
        %v342 = vpack.c.b16 %v341, %v340
        %vm343 = vcmask 146432
        %v345 = vsel %vm343, %v342, 0
        %vm347 = vcmask 1040384
        %v349 = vsel %vm347, %v327, 0
        %351 = vmatprep.subr.bf16.mxu0 0
        %352 = vmatpush1.bf16.msra.mxu0 0
        %353 = vmatprep.subr.bf16.mxu0 0
        %354 = vmatpush1.bf16.msra.mxu0 0
        %355 = vmatprep.subr.bf16.mxu0 0
        %356 = vmatpush1.bf16.msra.mxu0 0
        %357 = vmatprep.subr.bf16.mxu0 0
        %358 = vmatpush1.bf16.msra.mxu0 0
        %359 = vmatprep.subr.bf16.mxu0 0
        %360 = vmatpush1.bf16.msra.mxu0 0
        %361 = vmatprep.subr.bf16.mxu0 0
        %362 = vmatpush1.bf16.msra.mxu0 0
        %363 = vmatprep.subr.bf16.mxu0 0
        %364 = vmatpush1.bf16.msra.mxu0 %v349
        %365 = vmatprep.subr.bf16.mxu0 0
        %366 = vmatpush1.bf16.msra.mxu0 %v326
        %367 = vmatprep.subr.bf16.mxu0 0
        %368 = vmatpush2.bf16.msra.mxu0 0
        %369 = vmatprep.subr.bf16.mxu0 0
        %370 = vmatpush2.bf16.msra.mxu0 0
        %371 = vmatprep.subr.bf16.mxu0 0
        %372 = vmatpush2.bf16.msra.mxu0 0
        %373 = vmatprep.subr.bf16.mxu0 0
        %374 = vmatpush2.bf16.msra.mxu0 0
        %375 = vmatprep.subr.bf16.mxu0 0
        %376 = vmatpush2.bf16.msra.mxu0 0
        %377 = vmatprep.subr.bf16.mxu0 0
        %378 = vmatpush2.bf16.msra.mxu0 0
        %379 = vmatprep.subr.bf16.mxu0 0
        %380 = vmatpush2.bf16.msra.mxu0 0
        %381 = vmatprep.subr.bf16.mxu0 0
        %382 = vmatpush2.bf16.msra.mxu0 0
        %383 = vmatprep.mubr.bf16.mxu0 0
        %384 = vmatmul.mubr.bf16.gmra.mxu0 %v345
        %v385 = vpop.f32.mrf.mxu0
        %v386 = vadd.f32 %v331, %v385
        %v387 = vpop.f32.mrf.mxu0
        %v388 = vpop.f32.mrf.mxu0
        %v389 = vadd.f32 %v336, %v388
        %v390 = vpop.f32.mrf.mxu0
        %391 = vdwg.mxu0
        %v392 = vmul.f32 %v386, 0.5
        %v393 = vmul.f32 %v389, 0.5
        %v394 = vtanh.pop %v392
        %v395 = vtanh.pop %v393
        %v396 = vmul.f32 %v386, 1.442695
        %v397 = vpow.pop %v396
        %v398 = vmul.f32 %v389, 1.442695
        %v399 = vpow.pop %v398
        %v400 = vadd.f32 %v397, 1.0
        %v401 = vadd.f32 %v399, 1.0
        %v402 = vmul.f32 %v394, %v400
        %v403 = vmul.f32 %v395, %v401
        %vm404 = vcmp.gt.f32.partialorder %v386, 0.0
        %vm405 = vcmp.gt.f32.partialorder %v389, 0.0
        %v406 = vsel %vm404, %v386, %v402
        %v407 = vsel %vm405, %v389, %v403
        %vm408 = vcmask 261120
        %v410 = vsel %vm408, %v406, 0
        %v413 = vsel %vm408, %v407, 0
        %415 = vmatprep.subr.mxu0 0.0
        %416 = vmatpush1.msra.mxu0 0.0
        %417 = vmatprep.subr.mxu0 0.0
        %418 = vmatpush1.msra.mxu0 0.0
        %419 = vmatprep.subr.mxu0 0.0
        %420 = vmatpush1.msra.mxu0 0.0
        %421 = vmatprep.subr.mxu0 0.0
        %422 = vmatpush1.msra.mxu0 0.0
        %423 = vmatprep.subr.mxu0 0.0
        %424 = vmatpush1.msra.mxu0 0.0
        %425 = vmatprep.subr.mxu0 0.0
        %426 = vmatpush1.msra.mxu0 0.0
        %427 = vmatprep.subr.mxu0 0.0
        %428 = vmatpush1.msra.mxu0 0.0
        %429 = vmatprep.subr.mxu0 0.0
        %430 = vmatpush1.msra.mxu0 0.0
        %431 = vmatprep.subr.mxu0 0.0
        %432 = vmatpush1.msra.mxu0 0.0
        %433 = vmatprep.subr.mxu0 0.0
        %434 = vmatpush1.msra.mxu0 0.0
        %435 = vmatprep.subr.mxu0 0.0
        %436 = vmatpush1.msra.mxu0 0.0
        %437 = vmatprep.subr.mxu0 0.0
        %438 = vmatpush1.msra.mxu0 0.0
        %439 = vmatprep.subr.mxu0 0.0
        %440 = vmatpush1.msra.mxu0 %v322
        %441 = vmatprep.subr.mxu0 0.0
        %442 = vmatpush1.msra.mxu0 %v321
        %443 = vmatprep.subr.mxu0 0.0
        %444 = vmatpush1.msra.mxu0 %v320
        %445 = vmatprep.subr.mxu0 0.0
        %446 = vmatpush1.msra.mxu0 %v319
        %447 = vmatprep.subr.mxu0 0.0
        %448 = vmatpush2.msra.mxu0 0.0
        %449 = vmatprep.subr.mxu0 0.0
        %450 = vmatpush2.msra.mxu0 0.0
        %451 = vmatprep.subr.mxu0 0.0
        %452 = vmatpush2.msra.mxu0 0.0
        %453 = vmatprep.subr.mxu0 0.0
        %454 = vmatpush2.msra.mxu0 0.0
        %455 = vmatprep.subr.mxu0 0.0
        %456 = vmatpush2.msra.mxu0 0.0
        %457 = vmatprep.subr.mxu0 0.0
        %458 = vmatpush2.msra.mxu0 0.0
        %459 = vmatprep.subr.mxu0 0.0
        %460 = vmatpush2.msra.mxu0 0.0
        %461 = vmatprep.subr.mxu0 0.0
        %462 = vmatpush2.msra.mxu0 0.0
        %463 = vmatprep.subr.mxu0 0.0
        %464 = vmatpush2.msra.mxu0 0.0
        %465 = vmatprep.subr.mxu0 0.0
        %466 = vmatpush2.msra.mxu0 0.0
        %467 = vmatprep.subr.mxu0 0.0
        %468 = vmatpush2.msra.mxu0 0.0
        %469 = vmatprep.subr.mxu0 0.0
        %470 = vmatpush2.msra.mxu0 0.0
        %471 = vmatprep.subr.mxu0 0.0
        %472 = vmatpush2.msra.mxu0 0.0
        %473 = vmatprep.subr.mxu0 0.0
        %474 = vmatpush2.msra.mxu0 0.0
        %475 = vmatprep.subr.mxu0 0.0
        %476 = vmatpush2.msra.mxu0 0.0
        %477 = vmatprep.subr.mxu0 0.0
        %478 = vmatpush2.msra.mxu0 0.0
        %479 = vmatprep.mubr.f32.mxu0 0.0
        %480 = vmatmul.mubr.f32.gmra.mxu0 %v410
        %v481 = vpop.f32.mrf.mxu0
        %v482 = vadd.f32 0.0, %v481
        %v483 = vpop.f32.mrf.mxu0
        %484 = vmatprep.mubr.f32.mxu0 0.0
        %485 = vmatmul.mubr.f32.gmra.mxu0 %v413
        %v486 = vpop.f32.mrf.mxu0
        %v487 = vadd.f32 0.0, %v486
        %v488 = vpop.f32.mrf.mxu0
        %489 = vdwg.mxu0
        %v490 = vmul.f32 %v406, %v406
        %v491 = vmul.f32 %v407, %v407
        %v493 = vsel %vm408, %v490, 0
        %v496 = vsel %vm408, %v491, 0
        %498 = vmatprep.subr.mxu0 0.0
        %499 = vmatpush1.msra.mxu0 0.0
        %500 = vmatprep.subr.mxu0 0.0
        %501 = vmatpush1.msra.mxu0 0.0
        %502 = vmatprep.subr.mxu0 0.0
        %503 = vmatpush1.msra.mxu0 0.0
        %504 = vmatprep.subr.mxu0 0.0
        %505 = vmatpush1.msra.mxu0 0.0
        %506 = vmatprep.subr.mxu0 0.0
        %507 = vmatpush1.msra.mxu0 0.0
        %508 = vmatprep.subr.mxu0 0.0
        %509 = vmatpush1.msra.mxu0 0.0
        %510 = vmatprep.subr.mxu0 0.0
        %511 = vmatpush1.msra.mxu0 0.0
        %512 = vmatprep.subr.mxu0 0.0
        %513 = vmatpush1.msra.mxu0 0.0
        %514 = vmatprep.subr.mxu0 0.0
        %515 = vmatpush1.msra.mxu0 0.0
        %516 = vmatprep.subr.mxu0 0.0
        %517 = vmatpush1.msra.mxu0 0.0
        %518 = vmatprep.subr.mxu0 0.0
        %519 = vmatpush1.msra.mxu0 0.0
        %520 = vmatprep.subr.mxu0 0.0
        %521 = vmatpush1.msra.mxu0 0.0
        %522 = vmatprep.subr.mxu0 0.0
        %523 = vmatpush1.msra.mxu0 %v322
        %524 = vmatprep.subr.mxu0 0.0
        %525 = vmatpush1.msra.mxu0 %v321
        %526 = vmatprep.subr.mxu0 0.0
        %527 = vmatpush1.msra.mxu0 %v320
        %528 = vmatprep.subr.mxu0 0.0
        %529 = vmatpush1.msra.mxu0 %v319
        %530 = vmatprep.subr.mxu0 0.0
        %531 = vmatpush2.msra.mxu0 0.0
        %532 = vmatprep.subr.mxu0 0.0
        %533 = vmatpush2.msra.mxu0 0.0
        %534 = vmatprep.subr.mxu0 0.0
        %535 = vmatpush2.msra.mxu0 0.0
        %536 = vmatprep.subr.mxu0 0.0
        %537 = vmatpush2.msra.mxu0 0.0
        %538 = vmatprep.subr.mxu0 0.0
        %539 = vmatpush2.msra.mxu0 0.0
        %540 = vmatprep.subr.mxu0 0.0
        %541 = vmatpush2.msra.mxu0 0.0
        %542 = vmatprep.subr.mxu0 0.0
        %543 = vmatpush2.msra.mxu0 0.0
        %544 = vmatprep.subr.mxu0 0.0
        %545 = vmatpush2.msra.mxu0 0.0
        %546 = vmatprep.subr.mxu0 0.0
        %547 = vmatpush2.msra.mxu0 0.0
        %548 = vmatprep.subr.mxu0 0.0
        %549 = vmatpush2.msra.mxu0 0.0
        %550 = vmatprep.subr.mxu0 0.0
        %551 = vmatpush2.msra.mxu0 0.0
        %552 = vmatprep.subr.mxu0 0.0
        %553 = vmatpush2.msra.mxu0 0.0
        %554 = vmatprep.subr.mxu0 0.0
        %555 = vmatpush2.msra.mxu0 0.0
        %556 = vmatprep.subr.mxu0 0.0
        %557 = vmatpush2.msra.mxu0 0.0
        %558 = vmatprep.subr.mxu0 0.0
        %559 = vmatpush2.msra.mxu0 0.0
        %560 = vmatprep.subr.mxu0 0.0
        %561 = vmatpush2.msra.mxu0 0.0
        %562 = vmatprep.mubr.f32.mxu0 0.0
        %563 = vmatmul.mubr.f32.gmra.mxu0 %v493
        %v564 = vpop.f32.mrf.mxu0
        %v565 = vadd.f32 0.0, %v564
        %v566 = vpop.f32.mrf.mxu0
        %567 = vmatprep.mubr.f32.mxu0 0.0
        %568 = vmatmul.mubr.f32.gmra.mxu0 %v496
        %v569 = vpop.f32.mrf.mxu0
        %v570 = vadd.f32 0.0, %v569
        %v571 = vpop.f32.mrf.mxu0
        %572 = vdwg.mxu0
        %v573 = vmul.f32 %v482, 0.125
        %v574 = vmul.f32 %v487, 0.125
        %v575 = vmul.f32 %v573, 8.0
        %v576 = vmul.f32 %v574, 8.0
        %v577 = vmul.f32 %v575, %v573
        %v578 = vmul.f32 %v576, %v574
        %v579 = vsub.f32 %v565, %v577
        %v580 = vsub.f32 %v570, %v578
        %v581 = vmul.f32 %v579, 0.14285715
        %v582 = vmul.f32 %v580, 0.14285715
        %v583 = vmax.f32 %v581, 0.0
        %v584 = vmax.f32 %v582, 0.0
        %v585 = vsub.f32 0.0, %v583
        %v586 = vsub.f32 0.0, %v584
        %v587 = vmul.f32 %v585, 1.442695
        %v588 = vpow.pop %v587
        %v589 = vmul.f32 %v586, 1.442695
        %v590 = vpow.pop %v589
        %v591 = vadd.f32 %v588, 1.0
        %v592 = vlog2.pop %v591
        %v593 = vmul.f32 %v592, 0.6931472
        %v594 = vmul.f32 -0.5, %v588
        %v595 = vadd.f32 %v594, 1.0
        %v596 = vmul.f32 %v595, %v588
        %v597 = vand.u32 2147483647, %v588
        %vm598 = vcmp.lt.f32.partialorder %v597, 0.0004427343
        %v599 = vsel %vm598, %v596, %v593
        %v600 = vadd.f32 %v590, 1.0
        %v601 = vlog2.pop %v600
        %v602 = vmul.f32 %v601, 0.6931472
        %v603 = vmul.f32 -0.5, %v590
        %v604 = vadd.f32 %v603, 1.0
        %v605 = vmul.f32 %v604, %v590
        %v606 = vand.u32 2147483647, %v590
        %vm607 = vcmp.lt.f32.partialorder %v606, 0.0004427343
        %v608 = vsel %vm607, %v605, %v602
        %v609 = vsub.f32 0.0, %v599
        %v610 = vsub.f32 0.0, %v608
        %vm611 = vcmask 31744
        %612 = vst.msk [vmem:[#allocation2] sm:$0xff] %vm611, %v609
        %vm613 = vcmask 27648
        %614 = vst.msk [vmem:[#allocation2 + $0x8] sm:$0xf] %vm613, %v610
        %s615 = scalar_lea.vmem %s307, 24
        %v616 = vld [vmem:[%s615] sm:$0xff]
        %v617 = vld [vmem:[%s615 + $0x8] sm:$0xff]
        %v618 = vld [vmem:[%s615 + $0x10] sm:$0x3]
        %v619 = vpack.c.bf16 %v617, %v616
        %v620 = vpack.c.bf16 %v618, %v618
        %v622 = vsel %vm347, %v620, 0
        %624 = vmatprep.subr.bf16.mxu0 0
        %625 = vmatpush1.bf16.msra.mxu0 0
        %626 = vmatprep.subr.bf16.mxu0 0
        %627 = vmatpush1.bf16.msra.mxu0 0
        %628 = vmatprep.subr.bf16.mxu0 0
        %629 = vmatpush1.bf16.msra.mxu0 0
        %630 = vmatprep.subr.bf16.mxu0 0
        %631 = vmatpush1.bf16.msra.mxu0 0
        %632 = vmatprep.subr.bf16.mxu0 0
        %633 = vmatpush1.bf16.msra.mxu0 0
        %634 = vmatprep.subr.bf16.mxu0 0
        %635 = vmatpush1.bf16.msra.mxu0 0
        %636 = vmatprep.subr.bf16.mxu0 0
        %637 = vmatpush1.bf16.msra.mxu0 %v622
        %638 = vmatprep.subr.bf16.mxu0 0
        %639 = vmatpush1.bf16.msra.mxu0 %v619
        %640 = vmatprep.subr.bf16.mxu0 0
        %641 = vmatpush2.bf16.msra.mxu0 0
        %642 = vmatprep.subr.bf16.mxu0 0
        %643 = vmatpush2.bf16.msra.mxu0 0
        %644 = vmatprep.subr.bf16.mxu0 0
        %645 = vmatpush2.bf16.msra.mxu0 0
        %646 = vmatprep.subr.bf16.mxu0 0
        %647 = vmatpush2.bf16.msra.mxu0 0
        %648 = vmatprep.subr.bf16.mxu0 0
        %649 = vmatpush2.bf16.msra.mxu0 0
        %650 = vmatprep.subr.bf16.mxu0 0
        %651 = vmatpush2.bf16.msra.mxu0 0
        %652 = vmatprep.subr.bf16.mxu0 0
        %653 = vmatpush2.bf16.msra.mxu0 0
        %654 = vmatprep.subr.bf16.mxu0 0
        %655 = vmatpush2.bf16.msra.mxu0 0
        %656 = vmatprep.mubr.bf16.mxu0 0
        %657 = vmatmul.mubr.bf16.gmra.mxu0 %v345
        %v658 = vpop.f32.mrf.mxu0
        %v659 = vadd.f32 %v331, %v658
        %v660 = vpop.f32.mrf.mxu0
        %v661 = vpop.f32.mrf.mxu0
        %v662 = vadd.f32 %v336, %v661
        %v663 = vpop.f32.mrf.mxu0
        %664 = vdwg.mxu0
        %v665 = vmul.f32 %v659, 0.5
        %v666 = vmul.f32 %v662, 0.5
        %v667 = vtanh.pop %v665
        %v668 = vtanh.pop %v666
        %v669 = vmul.f32 %v659, 1.442695
        %v670 = vpow.pop %v669
        %v671 = vmul.f32 %v662, 1.442695
        %v672 = vpow.pop %v671
        %v673 = vadd.f32 %v670, 1.0
        %v674 = vadd.f32 %v672, 1.0
        %v675 = vmul.f32 %v667, %v673
        %v676 = vmul.f32 %v668, %v674
        %vm677 = vcmp.gt.f32.partialorder %v659, 0.0
        %vm678 = vcmp.gt.f32.partialorder %v662, 0.0
        %v679 = vsel %vm677, %v659, %v675
        %v680 = vsel %vm678, %v662, %v676
        %v682 = vsel %vm408, %v679, 0
        %v685 = vsel %vm408, %v680, 0
        %687 = vmatprep.subr.mxu0 0.0
        %688 = vmatpush1.msra.mxu0 0.0
        %689 = vmatprep.subr.mxu0 0.0
        %690 = vmatpush1.msra.mxu0 0.0
        %691 = vmatprep.subr.mxu0 0.0
        %692 = vmatpush1.msra.mxu0 0.0
        %693 = vmatprep.subr.mxu0 0.0
        %694 = vmatpush1.msra.mxu0 0.0
        %695 = vmatprep.subr.mxu0 0.0
        %696 = vmatpush1.msra.mxu0 0.0
        %697 = vmatprep.subr.mxu0 0.0
        %698 = vmatpush1.msra.mxu0 0.0
        %699 = vmatprep.subr.mxu0 0.0
        %700 = vmatpush1.msra.mxu0 0.0
        %701 = vmatprep.subr.mxu0 0.0
        %702 = vmatpush1.msra.mxu0 0.0
        %703 = vmatprep.subr.mxu0 0.0
        %704 = vmatpush1.msra.mxu0 0.0
        %705 = vmatprep.subr.mxu0 0.0
        %706 = vmatpush1.msra.mxu0 0.0
        %707 = vmatprep.subr.mxu0 0.0
        %708 = vmatpush1.msra.mxu0 0.0
        %709 = vmatprep.subr.mxu0 0.0
        %710 = vmatpush1.msra.mxu0 0.0
        %711 = vmatprep.subr.mxu0 0.0
        %712 = vmatpush1.msra.mxu0 %v322
        %713 = vmatprep.subr.mxu0 0.0
        %714 = vmatpush1.msra.mxu0 %v321
        %715 = vmatprep.subr.mxu0 0.0
        %716 = vmatpush1.msra.mxu0 %v320
        %717 = vmatprep.subr.mxu0 0.0
        %718 = vmatpush1.msra.mxu0 %v319
        %719 = vmatprep.subr.mxu0 0.0
        %720 = vmatpush2.msra.mxu0 0.0
        %721 = vmatprep.subr.mxu0 0.0
        %722 = vmatpush2.msra.mxu0 0.0
        %723 = vmatprep.subr.mxu0 0.0
        %724 = vmatpush2.msra.mxu0 0.0
        %725 = vmatprep.subr.mxu0 0.0
        %726 = vmatpush2.msra.mxu0 0.0
        %727 = vmatprep.subr.mxu0 0.0
        %728 = vmatpush2.msra.mxu0 0.0
        %729 = vmatprep.subr.mxu0 0.0
        %730 = vmatpush2.msra.mxu0 0.0
        %731 = vmatprep.subr.mxu0 0.0
        %732 = vmatpush2.msra.mxu0 0.0
        %733 = vmatprep.subr.mxu0 0.0
        %734 = vmatpush2.msra.mxu0 0.0
        %735 = vmatprep.subr.mxu0 0.0
        %736 = vmatpush2.msra.mxu0 0.0
        %737 = vmatprep.subr.mxu0 0.0
        %738 = vmatpush2.msra.mxu0 0.0
        %739 = vmatprep.subr.mxu0 0.0
        %740 = vmatpush2.msra.mxu0 0.0
        %741 = vmatprep.subr.mxu0 0.0
        %742 = vmatpush2.msra.mxu0 0.0
        %743 = vmatprep.subr.mxu0 0.0
        %744 = vmatpush2.msra.mxu0 0.0
        %745 = vmatprep.subr.mxu0 0.0
        %746 = vmatpush2.msra.mxu0 0.0
        %747 = vmatprep.subr.mxu0 0.0
        %748 = vmatpush2.msra.mxu0 0.0
        %749 = vmatprep.subr.mxu0 0.0
        %750 = vmatpush2.msra.mxu0 0.0
        %751 = vmatprep.mubr.f32.mxu0 0.0
        %752 = vmatmul.mubr.f32.gmra.mxu0 %v682
        %v753 = vpop.f32.mrf.mxu0
        %v754 = vadd.f32 0.0, %v753
        %v755 = vpop.f32.mrf.mxu0
        %756 = vmatprep.mubr.f32.mxu0 0.0
        %757 = vmatmul.mubr.f32.gmra.mxu0 %v685
        %v758 = vpop.f32.mrf.mxu0
        %v759 = vadd.f32 0.0, %v758
        %v760 = vpop.f32.mrf.mxu0
        %761 = vdwg.mxu0
        %v762 = vmul.f32 %v679, %v679
        %v763 = vmul.f32 %v680, %v680
        %v765 = vsel %vm408, %v762, 0
        %v768 = vsel %vm408, %v763, 0
        %770 = vmatprep.subr.mxu0 0.0
        %771 = vmatpush1.msra.mxu0 0.0
        %772 = vmatprep.subr.mxu0 0.0
        %773 = vmatpush1.msra.mxu0 0.0
        %774 = vmatprep.subr.mxu0 0.0
        %775 = vmatpush1.msra.mxu0 0.0
        %776 = vmatprep.subr.mxu0 0.0
        %777 = vmatpush1.msra.mxu0 0.0
        %778 = vmatprep.subr.mxu0 0.0
        %779 = vmatpush1.msra.mxu0 0.0
        %780 = vmatprep.subr.mxu0 0.0
        %781 = vmatpush1.msra.mxu0 0.0
        %782 = vmatprep.subr.mxu0 0.0
        %783 = vmatpush1.msra.mxu0 0.0
        %784 = vmatprep.subr.mxu0 0.0
        %785 = vmatpush1.msra.mxu0 0.0
        %786 = vmatprep.subr.mxu0 0.0
        %787 = vmatpush1.msra.mxu0 0.0
        %788 = vmatprep.subr.mxu0 0.0
        %789 = vmatpush1.msra.mxu0 0.0
        %790 = vmatprep.subr.mxu0 0.0
        %791 = vmatpush1.msra.mxu0 0.0
        %792 = vmatprep.subr.mxu0 0.0
        %793 = vmatpush1.msra.mxu0 0.0
        %794 = vmatprep.subr.mxu0 0.0
        %795 = vmatpush1.msra.mxu0 %v322
        %796 = vmatprep.subr.mxu0 0.0
        %797 = vmatpush1.msra.mxu0 %v321
        %798 = vmatprep.subr.mxu0 0.0
        %799 = vmatpush1.msra.mxu0 %v320
        %800 = vmatprep.subr.mxu0 0.0
        %801 = vmatpush1.msra.mxu0 %v319
        %802 = vmatprep.subr.mxu0 0.0
        %803 = vmatpush2.msra.mxu0 0.0
        %804 = vmatprep.subr.mxu0 0.0
        %805 = vmatpush2.msra.mxu0 0.0
        %806 = vmatprep.subr.mxu0 0.0
        %807 = vmatpush2.msra.mxu0 0.0
        %808 = vmatprep.subr.mxu0 0.0
        %809 = vmatpush2.msra.mxu0 0.0
        %810 = vmatprep.subr.mxu0 0.0
        %811 = vmatpush2.msra.mxu0 0.0
        %812 = vmatprep.subr.mxu0 0.0
        %813 = vmatpush2.msra.mxu0 0.0
        %814 = vmatprep.subr.mxu0 0.0
        %815 = vmatpush2.msra.mxu0 0.0
        %816 = vmatprep.subr.mxu0 0.0
        %817 = vmatpush2.msra.mxu0 0.0
        %818 = vmatprep.subr.mxu0 0.0
        %819 = vmatpush2.msra.mxu0 0.0
        %820 = vmatprep.subr.mxu0 0.0
        %821 = vmatpush2.msra.mxu0 0.0
        %822 = vmatprep.subr.mxu0 0.0
        %823 = vmatpush2.msra.mxu0 0.0
        %824 = vmatprep.subr.mxu0 0.0
        %825 = vmatpush2.msra.mxu0 0.0
        %826 = vmatprep.subr.mxu0 0.0
        %827 = vmatpush2.msra.mxu0 0.0
        %828 = vmatprep.subr.mxu0 0.0
        %829 = vmatpush2.msra.mxu0 0.0
        %830 = vmatprep.subr.mxu0 0.0
        %831 = vmatpush2.msra.mxu0 0.0
        %832 = vmatprep.subr.mxu0 0.0
        %833 = vmatpush2.msra.mxu0 0.0
        %834 = vmatprep.mubr.f32.mxu0 0.0
        %835 = vmatmul.mubr.f32.gmra.mxu0 %v765
        %v836 = vpop.f32.mrf.mxu0
        %v837 = vadd.f32 0.0, %v836
        %v838 = vpop.f32.mrf.mxu0
        %839 = vmatprep.mubr.f32.mxu0 0.0
        %840 = vmatmul.mubr.f32.gmra.mxu0 %v768
        %v841 = vpop.f32.mrf.mxu0
        %v842 = vadd.f32 0.0, %v841
        %v843 = vpop.f32.mrf.mxu0
        %844 = vdwg.mxu0
        %v845 = vmul.f32 %v754, 0.125
        %v846 = vmul.f32 %v759, 0.125
        %v847 = vmul.f32 %v845, 8.0
        %v848 = vmul.f32 %v846, 8.0
        %v849 = vmul.f32 %v847, %v845
        %v850 = vmul.f32 %v848, %v846
        %v851 = vsub.f32 %v837, %v849
        %v852 = vsub.f32 %v842, %v850
        %v853 = vmul.f32 %v851, 0.14285715
        %v854 = vmul.f32 %v852, 0.14285715
        %v855 = vmax.f32 %v853, 0.0
        %v856 = vmax.f32 %v854, 0.0
        %v857 = vsub.f32 0.0, %v855
        %v858 = vsub.f32 0.0, %v856
        %v859 = vmul.f32 %v857, 1.442695
        %v860 = vpow.pop %v859
        %v861 = vmul.f32 %v858, 1.442695
        %v862 = vpow.pop %v861
        %v863 = vadd.f32 %v860, 1.0
        %v864 = vlog2.pop %v863
        %v865 = vmul.f32 %v864, 0.6931472
        %v866 = vmul.f32 -0.5, %v860
        %v867 = vadd.f32 %v866, 1.0
        %v868 = vmul.f32 %v867, %v860
        %v869 = vand.u32 2147483647, %v860
        %vm870 = vcmp.lt.f32.partialorder %v869, 0.0004427343
        %v871 = vsel %vm870, %v868, %v865
        %v872 = vadd.f32 %v862, 1.0
        %v873 = vlog2.pop %v872
        %v874 = vmul.f32 %v873, 0.6931472
        %v875 = vmul.f32 -0.5, %v862
        %v876 = vadd.f32 %v875, 1.0
        %v877 = vmul.f32 %v876, %v862
        %v878 = vand.u32 2147483647, %v862
        %vm879 = vcmp.lt.f32.partialorder %v878, 0.0004427343
        %v880 = vsel %vm879, %v877, %v874
        %v881 = vsub.f32 0.0, %v871
        %v882 = vsub.f32 0.0, %v880
        %s883 = scalar_lea.vmem [#allocation2], 16
        %884 = vst.msk [vmem:[%s883] sm:$0xff] %vm611, %v881
        %885 = vst.msk [vmem:[%s883 + $0x8] sm:$0xf] %vm613, %v882
        %v886 = vld [vmem:[%s272] sm:$0xff]
        %v887 = vld [vmem:[%s272 + $0x8] sm:$0xf]
        %v888 = vld [vmem:[%s272 + $0x10] sm:$0xff]
        %v889 = vld [vmem:[%s272 + $0x18] sm:$0xf]
        %v890 = vld [vmem:[%s272 + $0x20] sm:$0xff]
        %v891 = vld [vmem:[%s272 + $0x28] sm:$0xf]
        %v892 = vld [vmem:[%s272 + $0x30] sm:$0xff]
        %v893 = vld [vmem:[%s272 + $0x38] sm:$0xf]
        %v894 = vld [vmem:[#allocation2] sm:$0xff]
        %v895 = vld [vmem:[#allocation2 + $0x8] sm:$0xf]
        %v896 = vld [vmem:[#allocation2 + $0x10] sm:$0xff]
        %v897 = vld [vmem:[#allocation2 + $0x18] sm:$0xf]
        %v898 = vmul.f32 %v886, %v894
        %v899 = vmul.f32 %v887, %v895
        %v900 = vmul.f32 %v888, %v896
        %v901 = vmul.f32 %v889, %v897
        %v902 = vmul.f32 %v890, %v894
        %v903 = vmul.f32 %v891, %v895
        %v904 = vmul.f32 %v892, %v896
        %v905 = vmul.f32 %v893, %v897
        %v906 = vsel %vm611, %v898, 0.0
        %907 = vadd.xlane.f32.xlu0 %v906
        %v908 = vpop.xlane.xlu0 %907
        %v909 = vsel %vm613, %v899, 0.0
        %910 = vadd.xlane.f32.xlu0 %v909
        %v911 = vpop.xlane.xlu0 %910
        %v912 = vsel %vm611, %v900, 0.0
        %913 = vadd.xlane.f32.xlu0 %v912
        %v914 = vpop.xlane.xlu0 %913
        %v915 = vsel %vm613, %v901, 0.0
        %916 = vadd.xlane.f32.xlu0 %v915
        %v917 = vpop.xlane.xlu0 %916
        %v918 = vsel %vm611, %v902, 0.0
        %919 = vadd.xlane.f32.xlu0 %v918
        %v920 = vpop.xlane.xlu0 %919
        %v921 = vsel %vm613, %v903, 0.0
        %922 = vadd.xlane.f32.xlu0 %v921
        %v923 = vpop.xlane.xlu0 %922
        %v924 = vsel %vm611, %v904, 0.0
        %925 = vadd.xlane.f32.xlu0 %v924
        %v926 = vpop.xlane.xlu0 %925
        %v927 = vsel %vm613, %v905, 0.0
        %928 = vadd.xlane.f32.xlu0 %v927
        %v929 = vpop.xlane.xlu0 %928
        %v938 = vlaneseq
        %v939 = vand.u32 %v938, 127
        %v940 = vlaneseq
        %v941 = vshrl.u32 %v940, 7
        %v942 = vsub.s32 %v939, %v941
        %v943 = vrot.slane %v908, %v942
        %v944 = vadd.s32 %v939, 4294967288
        %v945 = vlaneseq
        %v946 = vshrl.u32 %v945, 7
        %v947 = vsub.s32 %v944, %v946
        %v948 = vrot.slane %v911, %v947
        %vm949 = vcmask 130112
        %v950 = vsel %vm949, %v948, %v943
        %v951 = vlaneseq
        %v952 = vshrl.u32 %v951, 7
        %v953 = vsub.s32 %v939, %v952
        %v954 = vrot.slane %v914, %v953
        %v955 = vlaneseq
        %v956 = vshrl.u32 %v955, 7
        %v957 = vsub.s32 %v944, %v956
        %v958 = vrot.slane %v917, %v957
        %v959 = vsel %vm949, %v958, %v954
        %v960 = vlaneseq
        %v961 = vshrl.u32 %v960, 7
        %v962 = vsub.s32 %v939, %v961
        %v963 = vrot.slane %v920, %v962
        %v964 = vlaneseq
        %v965 = vshrl.u32 %v964, 7
        %v966 = vsub.s32 %v944, %v965
        %v967 = vrot.slane %v923, %v966
        %v968 = vsel %vm949, %v967, %v963
        %v969 = vlaneseq
        %v970 = vshrl.u32 %v969, 7
        %v971 = vsub.s32 %v939, %v970
        %v972 = vrot.slane %v926, %v971
        %v973 = vlaneseq
        %v974 = vshrl.u32 %v973, 7
        %v975 = vsub.s32 %v944, %v974
        %v976 = vrot.slane %v929, %v975
        %v977 = vsel %vm949, %v976, %v972
        %vm978 = vcmask 1041409
        %v979 = vsel %vm978, %v959, %v950
        %v980 = vsel %vm978, %v977, %v968
        %vm983 = vcmask 91136
        %v984 = vsel %vm983, %v979, 0.0
        %985 = vadd.xlane.f32.xlu0 %v984
        %v986 = vpop.xlane.xlu0 %985
        %v987 = vsel %vm983, %v980, 0.0
        %988 = vadd.xlane.f32.xlu0 %v987
        %v989 = vpop.xlane.xlu0 %988
        %v992 = vlaneseq
        %v993 = vshrl.u32 %v992, 7
        %v994 = vsub.s32 %v939, %v993
        %v995 = vrot.slane %v986, %v994
        %v996 = vlaneseq
        %v997 = vshrl.u32 %v996, 7
        %v998 = vsub.s32 %v939, %v997
        %v999 = vrot.slane %v989, %v998
        %v1000 = vsel %vm978, %v999, %v995
        %vm1002 = vcmask 9216
        %v1003 = vsel %vm1002, %v1000, 0.0
        %1004 = vadd.xlane.f32.xlu0 %v1003
        %v1005 = vpop.xlane.xlu0 %1004
        %vm1006 = vcmask 1024
        %1007 = vst.msk [vmem:[%s313] sm:$0x3] %vm1006, %v1005
        %p1008 = scmp.lt.s32.totalorder %s16, 1
        %s1009 = scalar_select %p1008, %s16, 1
        %s1010 = smul.addr %s1009, 2
        %s1011 = scalar_lea.vmem %s5, %s1010
        // Predicated region
        $region79: #{tpu_custom_call.1} parent=73 // pred_check
          %p1012 = pneg %p149
        $region80: #{tpu_custom_call.1} parent=73 // pred_check_branch
          %1014 = sbr.rel (%p1012) target = $region82
        $region81: #{tpu_custom_call.1} parent=73 // pred_region
          _
        $region82: #{tpu_custom_call.1} parent=73 // pred_fallthru
          _
      $region74: #{tpu_custom_call.1} parent=5 // pred_fallthru
        _
      %p1015 = scmp.le.s32.totalorder 2, %s11
      // Predicated region
      $region83: #{tpu_custom_call.1} parent=5 // pred_check
        %p1016 = pneg %p1015
      $region84: #{tpu_custom_call.1} parent=5 // pred_check_branch
        %1018 = sbr.rel (%p1016) target = $region86
      $region85: #{tpu_custom_call.1} parent=5 // pred_region
        %s1019 = ssub.s32 %s11, 2
        // Predicated region
        $region87: #{tpu_custom_call.1} parent=85 // pred_check
          %p1020 = pneg %p155
        $region88: #{tpu_custom_call.1} parent=85 // pred_check_branch
          %1022 = sbr.rel (%p1020) target = $region90
        $region89: #{tpu_custom_call.1} parent=85 // pred_region
          %p1023 = scmp.lt.s32.totalorder %s17, 1
          %s1024 = scalar_select %p1023, %s17, 1
          %s1025 = smul.addr %s1024, 2
          %s1026 = scalar_lea.vmem %s5, %s1025
        $region90: #{tpu_custom_call.1} parent=85 // pred_fallthru
          _
      $region86: #{tpu_custom_call.1} parent=5 // pred_fallthru
        _
    $region6: #{tpu_custom_call.1} parent=1 // loop_footer
      %s15 = sadd.s32 1, %s11
    $region7: #{tpu_custom_call.1} parent=1 // loop_footer_branch
      %10 = sbr.rel target = $region3
    $region8: #{tpu_custom_call.1} parent=1 // loop_exit
      _

</llo_original>
